<compile_context>
chip_gen: v7x
topology: tpu7x:2x2x1
jax: 0.10.0
libtpu: 0.0.40
codegen_flags: <defaults>
</compile_context>

<pallas_src>
import functools

import jax
import jax.numpy as jnp
import numpy as np
from jax.experimental import pallas as pl
from jax.experimental.pallas import tpu as pltpu


def _upsample_nearest_kernel(x_ref, rep_ref, o_ref):
    """x_ref: (1, Rb, Wk); rep_ref: (Wk, Lb); o_ref: (1, Rb, Lb).

    One matmul (MXU) + one dense 2-D store.  rep is a 0/1 selection matrix, so
    at HIGHEST precision the result is exactly x[r, selected column].
    """
    o_ref[0] = jnp.dot(
        x_ref[0],
        rep_ref[...],
        preferred_element_type=jnp.float32,
        precision=jax.lax.Precision.HIGHEST,
    ).astype(o_ref.dtype)


def _pick_row_block(ch, lane_width, itemsize, target_bytes=2 * 1024 * 1024):
    """Row-block size: divides ch, multiple of 8 (or == ch), ~target_bytes output block."""
    max_rows = max(8, target_bytes // max(1, lane_width * itemsize))
    if ch <= max_rows:
        return ch
    rb = (max_rows // 8) * 8
    while rb >= 8:
        if ch % rb == 0:
            return rb
        rb -= 8
    # No multiple-of-8 divisor <= max_rows (pathological ch factorization):
    # fall back to the whole axis, which always satisfies the block-shape rules.
    return ch


def upsample_nearest(x, scale_factor, mode="nearest"):
    """Pallas TPU equivalent of F.interpolate(x, scale_factor, mode='nearest')."""
    if mode != "nearest":
        # TODO(synk): other interpolation modes (e.g. bilinear) are not implemented.
        raise NotImplementedError("only mode='nearest' is supported")
    if isinstance(scale_factor, (tuple, list)):
        # TODO(synk): per-axis scale factors (allowed by PyTorch) are not implemented.
        raise NotImplementedError("per-axis scale factors are not supported")
    s = int(scale_factor)
    if float(scale_factor) != float(s) or s < 1:
        # TODO(synk): non-integer scale factors (floor-based output size) not implemented.
        raise NotImplementedError("only integer scale factors are supported")
    if not jnp.issubdtype(x.dtype, jnp.floating):
        # TODO(synk): integer inputs (common for F.interpolate on images) need a
        # non-MXU replication path; not implemented here.
        raise NotImplementedError("only floating-point inputs are supported")
    if s == 1:
        return x

    n, c, h, w = x.shape
    ch = c * h
    ws = w * s

    # ---- W (lane) tiling ----------------------------------------------------
    # Tiled case (W % 128 == 0): 128-wide input chunks, output lane block Wk*s,
    # and a size-s grid axis handles the H-repeat (same matmul result written to
    # s different output column blocks).  Untiled case: the whole W axis is one
    # chunk and the H-repeat is folded into the replication matrix, so the
    # output lane block equals the full s*W*s (block-shape-rule safe).
    if w % 128 == 0:
        wk, w_blocks, s_axis = 128, w // 128, s
        lb = wk * s
    else:
        wk, w_blocks, s_axis = w, 1, 1
        lb = s * w * s

    # ---- replication matrix (built once; DMA'd once, stays VMEM-resident) ----
    # rep[v, k] = 1  iff output lane k selects input lane v:
    #   k = (i * wk * s if untiled else 0) + v * s + j,  j in [0, s)
    col = jnp.arange(lb, dtype=jnp.int32)
    sel = (col % (wk * s)) // s                                    # (lb,)
    rep = (sel[None, :] == jnp.arange(wk, dtype=jnp.int32)[:, None]).astype(x.dtype)

    # ---- row (C*H) tiling -----------------------------------------------------
    rb = _pick_row_block(ch, lb, x.dtype.itemsize)
    r_blocks = ch // rb

    # Free layout view of contiguous NCHW: (N, C, H, W) -> (N, C*H, W).
    x2 = x.reshape(n, ch, w)

    out3 = pl.pallas_call(
        _upsample_nearest_kernel,
        out_shape=jax.ShapeDtypeStruct((n, ch, s * ws), x.dtype),
        grid_spec=pltpu.PrefetchScalarGridSpec(
            num_scalar_prefetch=0,
            grid=(n, r_blocks, w_blocks, s_axis),
            in_specs=[
                # x: does not depend on the repeat index i -> no re-DMA across i.
                pl.BlockSpec((1, rb, wk), lambda b, r, wj, i: (b, r, wj)),
                # rep: constant block index -> fetched once, resident in VMEM.
                pl.BlockSpec((wk, lb), lambda b, r, wj, i: (0, 0)),
            ],
            out_specs=pl.BlockSpec(
                (1, rb, lb),
                lambda b, r, wj, i: (b, r, i * w_blocks + wj),
            ),
        ),
        compiler_params=pltpu.CompilerParams(
            # Every grid point writes a distinct output block -> all parallel
            # (lets v7x megacore shard even when N is 1).
            dimension_semantics=("parallel", "parallel", "parallel", "parallel"),
        ),
    )(x2, rep)

    # (N, C*H, s*W*s) has the exact same contiguous layout as (N, C, H*s, W*s):
    # this reshape is pure metadata (no data movement).
    return out3.reshape(n, c, h * s, ws)


def _reference(x, s):
    return jnp.repeat(jnp.repeat(x, s, axis=2), s, axis=3)


if __name__ == "__main__":
    # Main test (matches the module's typical use): small NCHW, scale 2.
    key = jax.random.PRNGKey(0)
    N, C, H, W = 2, 4, 16, 16
    scale = 2
    x = jax.random.normal(key, (N, C, H, W), dtype=jnp.float32)

    out = jax.block_until_ready(upsample_nearest(x, scale))
    ref = _reference(x, scale)
    assert out.shape == (N, C, H * scale, W * scale)
    np.testing.assert_allclose(np.asarray(out), np.asarray(ref), rtol=1e-6, atol=1e-6)

    # Wide-W case: exercises the W-tiled path (W % 128 == 0 -> extra grid axes).
    x_wide = jax.random.normal(jax.random.PRNGKey(1), (1, 2, 4, 128), dtype=jnp.float32)
    out_wide = jax.block_until_ready(upsample_nearest(x_wide, 2))
    np.testing.assert_allclose(
        np.asarray(out_wide), np.asarray(_reference(x_wide, 2)), rtol=1e-6, atol=1e-6
    )

    # Odd scale / non-aligned shapes: exercises the untiled (combined-rep) path.
    x_odd = jax.random.normal(jax.random.PRNGKey(2), (1, 3, 8, 12), dtype=jnp.float32)
    out_odd = jax.block_until_ready(upsample_nearest(x_odd, 3))
    np.testing.assert_allclose(
        np.asarray(out_odd), np.asarray(_reference(x_odd, 3)), rtol=1e-6, atol=1e-6
    )

    print("KERNEL_OK")
</pallas_src>

<mosaic_0001>
module attributes {stable_mosaic.version = 11 : i64} {
  func.func @_upsample_nearest_kernel(%arg0: i32, %arg1: i32, %arg2: i32, %arg3: i32, %arg4: memref<1x64x16xf32, #tpu.memory_space<vmem>>, %arg5: memref<16x64xf32, #tpu.memory_space<vmem>>, %arg6: memref<1x64x64xf32, #tpu.memory_space<vmem>>) attributes {dimension_semantics = [#tpu.dimension_semantics<parallel>, #tpu.dimension_semantics<parallel>, #tpu.dimension_semantics<parallel>, #tpu.dimension_semantics<parallel>], iteration_bounds = array<i64: 2, 1, 1, 1>, scalar_prefetch = 0 : i64, scratch_operands = 0 : i64, tpu.core_type = #tpu.core_type<tc>, window_params = [{transform_indices = @transform_0, window_bounds = array<i64: 1, 64, 16>}, {pipeline_mode = #tpu.pipeline_mode<synchronous>, transform_indices = @transform_1, window_bounds = array<i64: 16, 64>}, {transform_indices = @transform_2, window_bounds = array<i64: 1, 64, 64>}]} {
    %c0 = arith.constant 0 : index
    %c0_0 = arith.constant 0 : index
    %c0_1 = arith.constant 0 : index
    %0 = vector.load %arg4[%c0, %c0_0, %c0_1] : memref<1x64x16xf32, #tpu.memory_space<vmem>>, vector<1x64x16xf32>
    %1 = vector.shape_cast %0 : vector<1x64x16xf32> to vector<64x16xf32>
    %c0_2 = arith.constant 0 : index
    %c0_3 = arith.constant 0 : index
    %2 = vector.load %arg5[%c0_2, %c0_3] : memref<16x64xf32, #tpu.memory_space<vmem>>, vector<16x64xf32>
    %cst = arith.constant dense<0.000000e+00> : vector<64x64xf32>
    %3 = tpu.matmul %1, %2, %cst {dimension_numbers = #tpu.dot_dimension_numbers<[1], [0], [0], [1], [0, 0, 1, 1], [], []>, precision = #tpu.contract_precision<fp32>} : vector<64x16xf32>, vector<16x64xf32>, vector<64x64xf32> -> vector<64x64xf32>
    %c0_4 = arith.constant 0 : index
    %c0_5 = arith.constant 0 : index
    %c0_6 = arith.constant 0 : index
    %4 = vector.load %arg6[%c0_4, %c0_5, %c0_6] : memref<1x64x64xf32, #tpu.memory_space<vmem>>, vector<1x64x64xf32>
    %5 = vector.shape_cast %4 : vector<1x64x64xf32> to vector<64x64xf32>
    %6 = vector.shape_cast %3 : vector<64x64xf32> to vector<1x64x64xf32>
    tpu.vector_store %arg6[%c0_4, %c0_5, %c0_6], %6 {strides = array<i32>} : memref<1x64x64xf32, #tpu.memory_space<vmem>>, vector<1x64x64xf32>,
    return
  }
  func.func @transform_0(%arg0: i32, %arg1: i32, %arg2: i32, %arg3: i32) -> (i32, i32, i32) {
    %c0_i32 = arith.constant 0 : i32
    return %arg0, %arg1, %arg2 : i32, i32, i32
  }
  func.func @transform_1(%arg0: i32, %arg1: i32, %arg2: i32, %arg3: i32) -> (i32, i32) {
    %c0_i32 = arith.constant 0 : i32
    %c0_i32_0 = arith.constant 0 : i32
    %c0_i32_1 = arith.constant 0 : i32
    return %c0_i32, %c0_i32_0 : i32, i32
  }
  func.func @transform_2(%arg0: i32, %arg1: i32, %arg2: i32, %arg3: i32) -> (i32, i32, i32) {
    %c1_i32 = arith.constant 1 : i32
    %0 = arith.muli %arg3, %c1_i32 : i32
    %1 = arith.addi %0, %arg2 : i32
    %c0_i32 = arith.constant 0 : i32
    return %arg0, %arg1, %1 : i32, i32, i32
  }
}

</mosaic_0001>

<llo_original>
// kernel: tpu_custom_call.1
$region0: #{tpu_custom_call.1}
  #allocation0 [shape = 'u32[]', space=smem, size = 0x4, offset = 0x4, fixed_abs, tag = 'smem constant byte address 0x4 - core index']
  #allocation1 [shape = 'u32[144,128]{1,0:T(1,128)}', space=vmem, size = 0x12000, scoped, tag = 'internal scratch']
  %s0 = inlined_call_operand.vmem [shape: f32[2,64,16], index: 0, kind: input, shape index: {}]
  %s1 = inlined_call_operand.vmem [shape: f32[16,64], index: 1, kind: input, shape index: {}]
  %s2 = inlined_call_operand.hbm [shape: f32[2,64,64], index: 2, kind: output, shape index: {}]
  %s3 = sld [smem:[#allocation0]]
  $region41: #{tpu_custom_call.1} parent=0
    _
  %s5 = ssub.s32 1, %s3
  %s6 = scalar_select 0, %s5, %s3
  $region1: #{tpu_custom_call.1} parent=0
    #allocation2 [shape = 'u8[65536]{0}', space=vmem, size = 0x10000, scoped, tag = 'output window, operand 0']
    #allocation3 [shape = 's32[2]{0}', space=sflag, size = 0x8, scoped, tag = 'scoped memory for tpu_custom_call.1']
    %7 = vsyncpa [#allocation3], 0
    %s8 = scalar_lea.sflag [#allocation3], 1
    %9 = vsyncpa %s8, 0
    loop: start=0, step=1, limit=4
    $region2: #{tpu_custom_call.1} parent=1 // loop_pre_header
      _
    $region3: #{tpu_custom_call.1} parent=1 // loop_header
      %s11 = sphi 0, %s15
      %p12 = scmp.ge.s32.totalorder %s11, 4
      %s18 = sphi 0, %s44
      %s19 = sphi 0, %s40
      %s20 = sphi 0, %s36
      %s21 = sphi 0, %s32
      %s22 = sphi 0, %s18
      %s23 = sphi 0, %s19
      %s24 = sphi 0, %s20
      %s25 = sphi 0, %s21
      %s26 = sphi 0, %s22
      %s27 = sphi 0, %s23
      %s28 = sphi 0, %s24
      %s29 = sphi 0, %s25
      %s51 = sphi 0, %s53
      %s54 = sphi 0, %s51
      %s55 = sphi 0, %s54
      %s71 = sphi 0, %s55
      %s75 = sphi 0, %s75
      %s77 = sphi 0, %s75
      %s78 = sphi 0, %s77
      %s92 = sphi 0, %s78
      %s104 = sphi 0, %s106
      %s107 = sphi 0, %s104
      %s108 = sphi 0, %s107
      %s124 = sphi 0, %s108
    $region4: #{tpu_custom_call.1} parent=1 // loop_header_branch
      %14 = sbr.rel (%p12) target = $region8
    $region5: #{tpu_custom_call.1} parent=1 // loop_body
      %s16 = ssub.s32 %s11, 1
      %s17 = ssub.s32 %s11, 2
      %s30 = sadd.s32 1, %s21
      %p31 = scmp.ge.s32.totalorder %s30, 1
      %s32 = scalar_select %p31, 0, %s30
      %s33 = sadd.s32 1, %s20
      %s34 = scalar_select %p31, %s33, %s20
      %p35 = scmp.ge.s32.totalorder %s34, 1
      %s36 = scalar_select %p35, 0, %s34
      %s37 = sadd.s32 1, %s19
      %s38 = scalar_select %p35, %s37, %s19
      %p39 = scmp.ge.s32.totalorder %s38, 1
      %s40 = scalar_select %p39, 0, %s38
      %s41 = sadd.s32 1, %s18
      %s42 = scalar_select %p39, %s41, %s18
      %p43 = scmp.ge.s32.totalorder %s42, 2
      %s44 = scalar_select %p43, 0, %s42
      %s45 = ssub.s32 %s18, %s44
      %s46 = ssub.s32 %s19, %s40
      %s47 = sor.u32 %s45, %s46
      %s48 = ssub.s32 %s20, %s36
      %s49 = sor.u32 %s47, %s48
      %p50 = scmp.eq.s32.totalorder %s49, 0
      %s52 = sadd.s32 %s51, 1
      %s53 = scalar_select %p50, %s51, %s52
      %p56 = pneg %p50
      %p57 = scmp.eq.s32.totalorder %s11, 1
      %p58 = por %p56, %p57
      %p59 = scmp.ne.s32.totalorder %s51, %s54
      %p60 = scmp.eq.s32.totalorder %s11, 0
      %p61 = por %p59, %p60
      %p62 = scmp.ne.s32.totalorder %s51, %s54
      %p63 = scmp.eq.s32.totalorder %s16, 1
      %p64 = por %p62, %p63
      %p65 = scmp.ne.s32.totalorder %s54, %s55
      %p66 = scmp.eq.s32.totalorder %s16, 0
      %p67 = por %p65, %p66
      %p68 = scmp.ne.s32.totalorder %s54, %s55
      %p69 = scmp.eq.s32.totalorder %s17, 1
      %p70 = por %p68, %p69
      %p72 = scmp.ne.s32.totalorder %s55, %s71
      %p73 = scmp.eq.s32.totalorder %s17, 0
      %p74 = por %p72, %p73
      %s76 = sadd.s32 %s75, 1
      %p79 = scmp.eq.s32.totalorder %s11, 1
      %p80 = scmp.ne.s32.totalorder %s75, %s77
      %p81 = scmp.eq.s32.totalorder %s11, 0
      %p82 = por %p80, %p81
      %p83 = scmp.ne.s32.totalorder %s75, %s77
      %p84 = scmp.eq.s32.totalorder %s16, 1
      %p85 = por %p83, %p84
      %p86 = scmp.ne.s32.totalorder %s77, %s78
      %p87 = scmp.eq.s32.totalorder %s16, 0
      %p88 = por %p86, %p87
      %p89 = scmp.ne.s32.totalorder %s77, %s78
      %p90 = scmp.eq.s32.totalorder %s17, 1
      %p91 = por %p89, %p90
      %p93 = scmp.ne.s32.totalorder %s78, %s92
      %p94 = scmp.eq.s32.totalorder %s17, 0
      %p95 = por %p93, %p94
      %s96 = sadd.s32 %s21, %s20
      %s97 = sadd.s32 %s32, %s36
      %s98 = ssub.s32 %s18, %s44
      %s99 = ssub.s32 %s19, %s40
      %s100 = sor.u32 %s98, %s99
      %s101 = ssub.s32 %s96, %s97
      %s102 = sor.u32 %s100, %s101
      %p103 = scmp.eq.s32.totalorder %s102, 0
      %s105 = sadd.s32 %s104, 1
      %s106 = scalar_select %p103, %s104, %s105
      %p109 = pneg %p103
      %p110 = scmp.eq.s32.totalorder %s11, 1
      %p111 = por %p109, %p110
      %p112 = scmp.ne.s32.totalorder %s104, %s107
      %p113 = scmp.eq.s32.totalorder %s11, 0
      %p114 = por %p112, %p113
      %p115 = scmp.ne.s32.totalorder %s104, %s107
      %p116 = scmp.eq.s32.totalorder %s16, 1
      %p117 = por %p115, %p116
      %p118 = scmp.ne.s32.totalorder %s107, %s108
      %p119 = scmp.eq.s32.totalorder %s16, 0
      %p120 = por %p118, %p119
      %p121 = scmp.ne.s32.totalorder %s107, %s108
      %p122 = scmp.eq.s32.totalorder %s17, 1
      %p123 = por %p121, %p122
      %p125 = scmp.ne.s32.totalorder %s108, %s124
      %p126 = scmp.eq.s32.totalorder %s17, 0
      %p127 = por %p125, %p126
      %p128 = scmp.le.s32.totalorder 1, %s11
      %p129 = scmp.lt.s32.totalorder %s11, 3
      %p130 = pnand %p128, %p129
      %p131 = pneg %p130
      // Predicated region
      $region9: #{tpu_custom_call.1} parent=5 // pred_check
        _
      $region10: #{tpu_custom_call.1} parent=5 // pred_check_branch
        %133 = sbr.rel (%p130) target = $region12
      $region11: #{tpu_custom_call.1} parent=5 // pred_region
        %s134 = ssub.s32 %s11, 1
        // Predicated region
        $region13: #{tpu_custom_call.1} parent=11 // pred_check
          %p135 = pneg %p88
        $region14: #{tpu_custom_call.1} parent=11 // pred_check_branch
          %137 = sbr.rel (%p135) target = $region16
        $region15: #{tpu_custom_call.1} parent=11 // pred_region
          _
        $region16: #{tpu_custom_call.1} parent=11 // pred_fallthru
          _
      $region12: #{tpu_custom_call.1} parent=5 // pred_fallthru
        _
      %p138 = scmp.lt.s32.totalorder %s11, 2
      // Predicated region
      $region17: #{tpu_custom_call.1} parent=5 // pred_check
        %p139 = pneg %p138
      $region18: #{tpu_custom_call.1} parent=5 // pred_check_branch
        %141 = sbr.rel (%p139) target = $region20
      $region19: #{tpu_custom_call.1} parent=5 // pred_region
        // Predicated region
        $region21: #{tpu_custom_call.1} parent=19 // pred_check
          %p142 = pneg %p61
        $region22: #{tpu_custom_call.1} parent=19 // pred_check_branch
          %144 = sbr.rel (%p142) target = $region24
        $region23: #{tpu_custom_call.1} parent=19 // pred_region
          %s145 = smul.u32 8, %s19
          %p146 = scmp.lt.s32.totalorder %s18, 1
          %s147 = scalar_select %p146, %s18, 1
          %p148 = scmp.lt.s32.totalorder %s145, 7
          %s149 = scalar_select %p148, %s145, 7
          %p150 = scmp.lt.s32.totalorder %s20, 0
          %s151 = scalar_select %p150, %s20, 0
          %s152 = sadd.s32 %s151, %s149
          %s153 = smul.addr %s147, 8
          %s154 = sadd.s32 %s152, %s153
          %s155 = smul.addr %s154, 8
          %s156 = scalar_lea.vmem %s0, %s155
          %s157 = smul.u32 8, %s19
        $region24: #{tpu_custom_call.1} parent=19 // pred_fallthru
          _
      $region20: #{tpu_custom_call.1} parent=5 // pred_fallthru
        _
      %p158 = scmp.le.s32.totalorder 1, %s11
      %p159 = scmp.lt.s32.totalorder %s11, 3
      %p160 = pnand %p158, %p159
      %p161 = pneg %p160
      // Predicated region
      $region25: #{tpu_custom_call.1} parent=5 // pred_check
        _
      $region26: #{tpu_custom_call.1} parent=5 // pred_check_branch
        %163 = sbr.rel (%p160) target = $region28
      $region27: #{tpu_custom_call.1} parent=5 // pred_region
        %s164 = ssub.s32 %s11, 1
        %s165 = smul.u32 8, %s23
        %p166 = scmp.lt.s32.totalorder %s22, 1
        %s167 = scalar_select %p166, %s22, 1
        %p168 = scmp.lt.s32.totalorder %s165, 7
        %s169 = scalar_select %p168, %s165, 7
        %p170 = scmp.lt.s32.totalorder %s24, 0
        %s171 = scalar_select %p170, %s24, 0
        %s172 = sadd.s32 %s171, %s169
        %s173 = smul.addr %s167, 8
        %s174 = sadd.s32 %s172, %s173
        %s175 = smul.addr %s174, 8
        %s176 = scalar_lea.vmem %s0, %s175
        %p177 = pneg %p67
        %p178 = pneg %p64
        %p179 = pneg %p88
        %p180 = pneg %p85
        %p181 = pneg %p120
        %p182 = pneg %p117
        %s183 = sand.u32 %s107, 1
        %s184 = scalar_lea.sflag [#allocation3], %s183
        %s185 = sand.u32 %s107, 1
        %s186 = smul.addr %s185, 64
        %s187 = scalar_lea.vmem [#allocation2], %s186
        %s188 = smul.u32 8, %s23
        %p189 = scmp.lt.s32.totalorder %s22, 1
        %s190 = scalar_select %p189, %s22, 1
        %p191 = scmp.lt.s32.totalorder %s188, 7
        %s192 = scalar_select %p191, %s188, 7
        %p193 = scmp.lt.s32.totalorder %s24, 0
        %s194 = scalar_select %p193, %s24, 0
        %s195 = sadd.s32 %s194, %s192
        %s196 = smul.addr %s190, 8
        %s197 = sadd.s32 %s195, %s196
        %s198 = smul.addr %s197, 8
        %s199 = scalar_lea.vmem %s0, %s198
        %s200 = smul.u32 8, %s23
        %s201 = sadd.s32 %s25, %s24
        %s202 = smul.u32 8, %s23
        %v203 = vld [vmem:[%s199] sm:$0xff]
        %v204 = vld [vmem:[%s199 + $0x8] sm:$0xff]
        %v205 = vld [vmem:[%s199 + $0x10] sm:$0xff]
        %v206 = vld [vmem:[%s199 + $0x18] sm:$0xff]
        %v207 = vld [vmem:[%s199 + $0x20] sm:$0xff]
        %v208 = vld [vmem:[%s199 + $0x28] sm:$0xff]
        %v209 = vld [vmem:[%s199 + $0x30] sm:$0xff]
        %v210 = vld [vmem:[%s199 + $0x38] sm:$0xff]
        %v211 = vld [vmem:[%s1] sm:$0xff]
        %v212 = vld [vmem:[%s1 + $0x8] sm:$0xff]
        %vm213 = vcmask 130048
        %v215 = vsel %vm213, %v203, 0
        %v218 = vsel %vm213, %v204, 0
        %v221 = vsel %vm213, %v205, 0
        %v224 = vsel %vm213, %v206, 0
        %v227 = vsel %vm213, %v207, 0
        %v230 = vsel %vm213, %v208, 0
        %v233 = vsel %vm213, %v209, 0
        %v236 = vsel %vm213, %v210, 0
        %238 = vmatprep.subr.mxu0 0.0
        %v239 = vand.u32 %v211, 4294901760
        %240 = vmatpush1.msra.mxu0 %v239
        %241 = vmatprep.subr.mxu0 0.0
        %v242 = vand.u32 %v212, 4294901760
        %243 = vmatpush1.msra.mxu0 %v242
        %244 = vmatprep.subr.mxu0 0.0
        %245 = vmatpush1.msra.mxu0 0.0
        %246 = vmatprep.subr.mxu0 0.0
        %247 = vmatpush1.msra.mxu0 0.0
        %248 = vmatprep.subr.mxu0 0.0
        %249 = vmatpush1.msra.mxu0 0.0
        %250 = vmatprep.subr.mxu0 0.0
        %251 = vmatpush1.msra.mxu0 0.0
        %252 = vmatprep.subr.mxu0 0.0
        %253 = vmatpush1.msra.mxu0 0.0
        %254 = vmatprep.subr.mxu0 0.0
        %255 = vmatpush1.msra.mxu0 0.0
        %256 = vmatprep.subr.mxu0 0.0
        %257 = vmatpush1.msra.mxu0 0.0
        %258 = vmatprep.subr.mxu0 0.0
        %259 = vmatpush1.msra.mxu0 0.0
        %260 = vmatprep.subr.mxu0 0.0
        %261 = vmatpush1.msra.mxu0 0.0
        %262 = vmatprep.subr.mxu0 0.0
        %263 = vmatpush1.msra.mxu0 0.0
        %264 = vmatprep.subr.mxu0 0.0
        %265 = vmatpush1.msra.mxu0 0.0
        %266 = vmatprep.subr.mxu0 0.0
        %267 = vmatpush1.msra.mxu0 0.0
        %268 = vmatprep.subr.mxu0 0.0
        %269 = vmatpush1.msra.mxu0 0.0
        %270 = vmatprep.subr.mxu0 0.0
        %271 = vmatpush1.msra.mxu0 0.0
        %272 = vmatprep.subr.mxu0 0.0
        %273 = vmatpush1.msra.mxu0 0.0
        %274 = vmatprep.subr.mxu0 0.0
        %275 = vmatpush1.msra.mxu0 0.0
        %276 = vmatprep.subr.mxu0 0.0
        %277 = vmatpush1.msra.mxu0 0.0
        %278 = vmatprep.subr.mxu0 0.0
        %279 = vmatpush1.msra.mxu0 0.0
        %280 = vmatprep.subr.mxu0 0.0
        %281 = vmatpush1.msra.mxu0 0.0
        %282 = vmatprep.subr.mxu0 0.0
        %283 = vmatpush1.msra.mxu0 0.0
        %284 = vmatprep.subr.mxu0 0.0
        %285 = vmatpush1.msra.mxu0 0.0
        %286 = vmatprep.subr.mxu0 0.0
        %287 = vmatpush1.msra.mxu0 0.0
        %288 = vmatprep.subr.mxu0 0.0
        %289 = vmatpush1.msra.mxu0 0.0
        %290 = vmatprep.subr.mxu0 0.0
        %291 = vmatpush1.msra.mxu0 0.0
        %292 = vmatprep.subr.mxu0 0.0
        %293 = vmatpush1.msra.mxu0 0.0
        %294 = vmatprep.subr.mxu0 0.0
        %295 = vmatpush1.msra.mxu0 0.0
        %296 = vmatprep.subr.mxu0 0.0
        %297 = vmatpush1.msra.mxu0 0.0
        %298 = vmatprep.subr.mxu0 0.0
        %299 = vmatpush1.msra.mxu0 0.0
        %300 = vmatprep.subr.mxu0 0.0
        %301 = vmatpush1.msra.mxu0 0.0
        %302 = vmatprep.subr.mxu0 0.0
        %303 = vmatpush1.msra.mxu0 0.0
        %304 = vmatprep.mubr.f32.mxu0 0.0
        %v305 = vand.u32 %v215, 4294901760
        %v306 = vsub.f32 %v215, %v305
        %v307 = vand.u32 %v306, 4294901760
        %v308 = vsub.f32 %v306, %v307
        %v309 = vand.u32 %v308, 4294901760
        %310 = vmatmul.mubr.f32.gmra.mrb[0].mxu0 %v309
        %v311 = vpop.f32.mrb[0].mxu0
        %v312 = vadd.f32 0.0, %v311
        %v313 = vpop.f32.mrb[0].mxu0
        %314 = vmatprep.mubr.f32.mxu0 0.0
        %v315 = vand.u32 %v218, 4294901760
        %v316 = vsub.f32 %v218, %v315
        %v317 = vand.u32 %v316, 4294901760
        %v318 = vsub.f32 %v316, %v317
        %v319 = vand.u32 %v318, 4294901760
        %320 = vmatmul.mubr.f32.gmra.mrb[0].mxu0 %v319
        %v321 = vpop.f32.mrb[0].mxu0
        %v322 = vadd.f32 0.0, %v321
        %v323 = vpop.f32.mrb[0].mxu0
        %324 = vmatprep.mubr.f32.mxu0 0.0
        %v325 = vand.u32 %v221, 4294901760
        %v326 = vsub.f32 %v221, %v325
        %v327 = vand.u32 %v326, 4294901760
        %v328 = vsub.f32 %v326, %v327
        %v329 = vand.u32 %v328, 4294901760
        %330 = vmatmul.mubr.f32.gmra.mrb[0].mxu0 %v329
        %v331 = vpop.f32.mrb[0].mxu0
        %v332 = vadd.f32 0.0, %v331
        %v333 = vpop.f32.mrb[0].mxu0
        %334 = vmatprep.mubr.f32.mxu0 0.0
        %v335 = vand.u32 %v224, 4294901760
        %v336 = vsub.f32 %v224, %v335
        %v337 = vand.u32 %v336, 4294901760
        %v338 = vsub.f32 %v336, %v337
        %v339 = vand.u32 %v338, 4294901760
        %340 = vmatmul.mubr.f32.gmra.mrb[0].mxu0 %v339
        %v341 = vpop.f32.mrb[0].mxu0
        %v342 = vadd.f32 0.0, %v341
        %v343 = vpop.f32.mrb[0].mxu0
        %344 = vmatprep.mubr.f32.mxu0 0.0
        %v345 = vand.u32 %v227, 4294901760
        %v346 = vsub.f32 %v227, %v345
        %v347 = vand.u32 %v346, 4294901760
        %v348 = vsub.f32 %v346, %v347
        %v349 = vand.u32 %v348, 4294901760
        %350 = vmatmul.mubr.f32.gmra.mrb[0].mxu0 %v349
        %v351 = vpop.f32.mrb[0].mxu0
        %v352 = vadd.f32 0.0, %v351
        %v353 = vpop.f32.mrb[0].mxu0
        %354 = vmatprep.mubr.f32.mxu0 0.0
        %v355 = vand.u32 %v230, 4294901760
        %v356 = vsub.f32 %v230, %v355
        %v357 = vand.u32 %v356, 4294901760
        %v358 = vsub.f32 %v356, %v357
        %v359 = vand.u32 %v358, 4294901760
        %360 = vmatmul.mubr.f32.gmra.mrb[0].mxu0 %v359
        %v361 = vpop.f32.mrb[0].mxu0
        %v362 = vadd.f32 0.0, %v361
        %v363 = vpop.f32.mrb[0].mxu0
        %364 = vmatprep.mubr.f32.mxu0 0.0
        %v365 = vand.u32 %v233, 4294901760
        %v366 = vsub.f32 %v233, %v365
        %v367 = vand.u32 %v366, 4294901760
        %v368 = vsub.f32 %v366, %v367
        %v369 = vand.u32 %v368, 4294901760
        %370 = vmatmul.mubr.f32.gmra.mrb[0].mxu0 %v369
        %v371 = vpop.f32.mrb[0].mxu0
        %v372 = vadd.f32 0.0, %v371
        %v373 = vpop.f32.mrb[0].mxu0
        %374 = vmatprep.mubr.f32.mxu0 0.0
        %v375 = vand.u32 %v236, 4294901760
        %v376 = vsub.f32 %v236, %v375
        %v377 = vand.u32 %v376, 4294901760
        %v378 = vsub.f32 %v376, %v377
        %v379 = vand.u32 %v378, 4294901760
        %380 = vmatmul.mubr.f32.gmra.mrb[0].mxu0 %v379
        %v381 = vpop.f32.mrb[0].mxu0
        %v382 = vadd.f32 0.0, %v381
        %v383 = vpop.f32.mrb[0].mxu0
        %384 = vdwg.mxu0
        %385 = vmatprep.subr.mxu0 0.0
        %v386 = vand.u32 %v211, 4294901760
        %v387 = vsub.f32 %v211, %v386
        %v388 = vand.u32 %v387, 4294901760
        %v389 = vsub.f32 %v387, %v388
        %v390 = vand.u32 %v389, 4294901760
        %391 = vmatpush1.msra.mxu0 %v390
        %392 = vmatprep.subr.mxu0 0.0
        %v393 = vand.u32 %v212, 4294901760
        %v394 = vsub.f32 %v212, %v393
        %v395 = vand.u32 %v394, 4294901760
        %v396 = vsub.f32 %v394, %v395
        %v397 = vand.u32 %v396, 4294901760
        %398 = vmatpush1.msra.mxu0 %v397
        %399 = vmatprep.subr.mxu0 0.0
        %400 = vmatpush1.msra.mxu0 0.0
        %401 = vmatprep.subr.mxu0 0.0
        %402 = vmatpush1.msra.mxu0 0.0
        %403 = vmatprep.subr.mxu0 0.0
        %404 = vmatpush1.msra.mxu0 0.0
        %405 = vmatprep.subr.mxu0 0.0
        %406 = vmatpush1.msra.mxu0 0.0
        %407 = vmatprep.subr.mxu0 0.0
        %408 = vmatpush1.msra.mxu0 0.0
        %409 = vmatprep.subr.mxu0 0.0
        %410 = vmatpush1.msra.mxu0 0.0
        %411 = vmatprep.subr.mxu0 0.0
        %412 = vmatpush1.msra.mxu0 0.0
        %413 = vmatprep.subr.mxu0 0.0
        %414 = vmatpush1.msra.mxu0 0.0
        %415 = vmatprep.subr.mxu0 0.0
        %416 = vmatpush1.msra.mxu0 0.0
        %417 = vmatprep.subr.mxu0 0.0
        %418 = vmatpush1.msra.mxu0 0.0
        %419 = vmatprep.subr.mxu0 0.0
        %420 = vmatpush1.msra.mxu0 0.0
        %421 = vmatprep.subr.mxu0 0.0
        %422 = vmatpush1.msra.mxu0 0.0
        %423 = vmatprep.subr.mxu0 0.0
        %424 = vmatpush1.msra.mxu0 0.0
        %425 = vmatprep.subr.mxu0 0.0
        %426 = vmatpush1.msra.mxu0 0.0
        %427 = vmatprep.subr.mxu0 0.0
        %428 = vmatpush1.msra.mxu0 0.0
        %429 = vmatprep.subr.mxu0 0.0
        %430 = vmatpush1.msra.mxu0 0.0
        %431 = vmatprep.subr.mxu0 0.0
        %432 = vmatpush1.msra.mxu0 0.0
        %433 = vmatprep.subr.mxu0 0.0
        %434 = vmatpush1.msra.mxu0 0.0
        %435 = vmatprep.subr.mxu0 0.0
        %436 = vmatpush1.msra.mxu0 0.0
        %437 = vmatprep.subr.mxu0 0.0
        %438 = vmatpush1.msra.mxu0 0.0
        %439 = vmatprep.subr.mxu0 0.0
        %440 = vmatpush1.msra.mxu0 0.0
        %441 = vmatprep.subr.mxu0 0.0
        %442 = vmatpush1.msra.mxu0 0.0
        %443 = vmatprep.subr.mxu0 0.0
        %444 = vmatpush1.msra.mxu0 0.0
        %445 = vmatprep.subr.mxu0 0.0
        %446 = vmatpush1.msra.mxu0 0.0
        %447 = vmatprep.subr.mxu0 0.0
        %448 = vmatpush1.msra.mxu0 0.0
        %449 = vmatprep.subr.mxu0 0.0
        %450 = vmatpush1.msra.mxu0 0.0
        %451 = vmatprep.subr.mxu0 0.0
        %452 = vmatpush1.msra.mxu0 0.0
        %453 = vmatprep.subr.mxu0 0.0
        %454 = vmatpush1.msra.mxu0 0.0
        %455 = vmatprep.subr.mxu0 0.0
        %456 = vmatpush1.msra.mxu0 0.0
        %457 = vmatprep.subr.mxu0 0.0
        %458 = vmatpush1.msra.mxu0 0.0
        %459 = vmatprep.mubr.f32.mxu0 0.0
        %v460 = vand.u32 %v215, 4294901760
        %461 = vmatmul.mubr.f32.gmra.mrb[0].mxu0 %v460
        %v462 = vpop.f32.mrb[0].mxu0
        %v463 = vadd.f32 %v312, %v462
        %v464 = vpop.f32.mrb[0].mxu0
        %465 = vmatprep.mubr.f32.mxu0 0.0
        %v466 = vand.u32 %v218, 4294901760
        %467 = vmatmul.mubr.f32.gmra.mrb[0].mxu0 %v466
        %v468 = vpop.f32.mrb[0].mxu0
        %v469 = vadd.f32 %v322, %v468
        %v470 = vpop.f32.mrb[0].mxu0
        %471 = vmatprep.mubr.f32.mxu0 0.0
        %v472 = vand.u32 %v221, 4294901760
        %473 = vmatmul.mubr.f32.gmra.mrb[0].mxu0 %v472
        %v474 = vpop.f32.mrb[0].mxu0
        %v475 = vadd.f32 %v332, %v474
        %v476 = vpop.f32.mrb[0].mxu0
        %477 = vmatprep.mubr.f32.mxu0 0.0
        %v478 = vand.u32 %v224, 4294901760
        %479 = vmatmul.mubr.f32.gmra.mrb[0].mxu0 %v478
        %v480 = vpop.f32.mrb[0].mxu0
        %v481 = vadd.f32 %v342, %v480
        %v482 = vpop.f32.mrb[0].mxu0
        %483 = vmatprep.mubr.f32.mxu0 0.0
        %v484 = vand.u32 %v227, 4294901760
        %485 = vmatmul.mubr.f32.gmra.mrb[0].mxu0 %v484
        %v486 = vpop.f32.mrb[0].mxu0
        %v487 = vadd.f32 %v352, %v486
        %v488 = vpop.f32.mrb[0].mxu0
        %489 = vmatprep.mubr.f32.mxu0 0.0
        %v490 = vand.u32 %v230, 4294901760
        %491 = vmatmul.mubr.f32.gmra.mrb[0].mxu0 %v490
        %v492 = vpop.f32.mrb[0].mxu0
        %v493 = vadd.f32 %v362, %v492
        %v494 = vpop.f32.mrb[0].mxu0
        %495 = vmatprep.mubr.f32.mxu0 0.0
        %v496 = vand.u32 %v233, 4294901760
        %497 = vmatmul.mubr.f32.gmra.mrb[0].mxu0 %v496
        %v498 = vpop.f32.mrb[0].mxu0
        %v499 = vadd.f32 %v372, %v498
        %v500 = vpop.f32.mrb[0].mxu0
        %501 = vmatprep.mubr.f32.mxu0 0.0
        %v502 = vand.u32 %v236, 4294901760
        %503 = vmatmul.mubr.f32.gmra.mrb[0].mxu0 %v502
        %v504 = vpop.f32.mrb[0].mxu0
        %v505 = vadd.f32 %v382, %v504
        %v506 = vpop.f32.mrb[0].mxu0
        %507 = vdwg.mxu0
        %508 = vmatprep.subr.mxu0 0.0
        %v509 = vand.u32 %v211, 4294901760
        %v510 = vsub.f32 %v211, %v509
        %511 = vmatpush1.msra.mxu0 %v510
        %512 = vmatprep.subr.mxu0 0.0
        %v513 = vand.u32 %v212, 4294901760
        %v514 = vsub.f32 %v212, %v513
        %515 = vmatpush1.msra.mxu0 %v514
        %516 = vmatprep.subr.mxu0 0.0
        %517 = vmatpush1.msra.mxu0 0.0
        %518 = vmatprep.subr.mxu0 0.0
        %519 = vmatpush1.msra.mxu0 0.0
        %520 = vmatprep.subr.mxu0 0.0
        %521 = vmatpush1.msra.mxu0 0.0
        %522 = vmatprep.subr.mxu0 0.0
        %523 = vmatpush1.msra.mxu0 0.0
        %524 = vmatprep.subr.mxu0 0.0
        %525 = vmatpush1.msra.mxu0 0.0
        %526 = vmatprep.subr.mxu0 0.0
        %527 = vmatpush1.msra.mxu0 0.0
        %528 = vmatprep.subr.mxu0 0.0
        %529 = vmatpush1.msra.mxu0 0.0
        %530 = vmatprep.subr.mxu0 0.0
        %531 = vmatpush1.msra.mxu0 0.0
        %532 = vmatprep.subr.mxu0 0.0
        %533 = vmatpush1.msra.mxu0 0.0
        %534 = vmatprep.subr.mxu0 0.0
        %535 = vmatpush1.msra.mxu0 0.0
        %536 = vmatprep.subr.mxu0 0.0
        %537 = vmatpush1.msra.mxu0 0.0
        %538 = vmatprep.subr.mxu0 0.0
        %539 = vmatpush1.msra.mxu0 0.0
        %540 = vmatprep.subr.mxu0 0.0
        %541 = vmatpush1.msra.mxu0 0.0
        %542 = vmatprep.subr.mxu0 0.0
        %543 = vmatpush1.msra.mxu0 0.0
        %544 = vmatprep.subr.mxu0 0.0
        %545 = vmatpush1.msra.mxu0 0.0
        %546 = vmatprep.subr.mxu0 0.0
        %547 = vmatpush1.msra.mxu0 0.0
        %548 = vmatprep.subr.mxu0 0.0
        %549 = vmatpush1.msra.mxu0 0.0
        %550 = vmatprep.subr.mxu0 0.0
        %551 = vmatpush1.msra.mxu0 0.0
        %552 = vmatprep.subr.mxu0 0.0
        %553 = vmatpush1.msra.mxu0 0.0
        %554 = vmatprep.subr.mxu0 0.0
        %555 = vmatpush1.msra.mxu0 0.0
        %556 = vmatprep.subr.mxu0 0.0
        %557 = vmatpush1.msra.mxu0 0.0
        %558 = vmatprep.subr.mxu0 0.0
        %559 = vmatpush1.msra.mxu0 0.0
        %560 = vmatprep.subr.mxu0 0.0
        %561 = vmatpush1.msra.mxu0 0.0
        %562 = vmatprep.subr.mxu0 0.0
        %563 = vmatpush1.msra.mxu0 0.0
        %564 = vmatprep.subr.mxu0 0.0
        %565 = vmatpush1.msra.mxu0 0.0
        %566 = vmatprep.subr.mxu0 0.0
        %567 = vmatpush1.msra.mxu0 0.0
        %568 = vmatprep.subr.mxu0 0.0
        %569 = vmatpush1.msra.mxu0 0.0
        %570 = vmatprep.subr.mxu0 0.0
        %571 = vmatpush1.msra.mxu0 0.0
        %572 = vmatprep.subr.mxu0 0.0
        %573 = vmatpush1.msra.mxu0 0.0
        %574 = vmatprep.subr.mxu0 0.0
        %575 = vmatpush1.msra.mxu0 0.0
        %576 = vmatprep.mubr.f32.mxu0 0.0
        %v577 = vand.u32 %v215, 4294901760
        %v578 = vsub.f32 %v215, %v577
        %579 = vmatmul.mubr.f32.gmra.mrb[0].mxu0 %v578
        %v580 = vpop.f32.mrb[0].mxu0
        %v581 = vadd.f32 %v463, %v580
        %v582 = vpop.f32.mrb[0].mxu0
        %583 = vmatprep.mubr.f32.mxu0 0.0
        %v584 = vand.u32 %v218, 4294901760
        %v585 = vsub.f32 %v218, %v584
        %586 = vmatmul.mubr.f32.gmra.mrb[0].mxu0 %v585
        %v587 = vpop.f32.mrb[0].mxu0
        %v588 = vadd.f32 %v469, %v587
        %v589 = vpop.f32.mrb[0].mxu0
        %590 = vmatprep.mubr.f32.mxu0 0.0
        %v591 = vand.u32 %v221, 4294901760
        %v592 = vsub.f32 %v221, %v591
        %593 = vmatmul.mubr.f32.gmra.mrb[0].mxu0 %v592
        %v594 = vpop.f32.mrb[0].mxu0
        %v595 = vadd.f32 %v475, %v594
        %v596 = vpop.f32.mrb[0].mxu0
        %597 = vmatprep.mubr.f32.mxu0 0.0
        %v598 = vand.u32 %v224, 4294901760
        %v599 = vsub.f32 %v224, %v598
        %600 = vmatmul.mubr.f32.gmra.mrb[0].mxu0 %v599
        %v601 = vpop.f32.mrb[0].mxu0
        %v602 = vadd.f32 %v481, %v601
        %v603 = vpop.f32.mrb[0].mxu0
        %604 = vmatprep.mubr.f32.mxu0 0.0
        %v605 = vand.u32 %v227, 4294901760
        %v606 = vsub.f32 %v227, %v605
        %607 = vmatmul.mubr.f32.gmra.mrb[0].mxu0 %v606
        %v608 = vpop.f32.mrb[0].mxu0
        %v609 = vadd.f32 %v487, %v608
        %v610 = vpop.f32.mrb[0].mxu0
        %611 = vmatprep.mubr.f32.mxu0 0.0
        %v612 = vand.u32 %v230, 4294901760
        %v613 = vsub.f32 %v230, %v612
        %614 = vmatmul.mubr.f32.gmra.mrb[0].mxu0 %v613
        %v615 = vpop.f32.mrb[0].mxu0
        %v616 = vadd.f32 %v493, %v615
        %v617 = vpop.f32.mrb[0].mxu0
        %618 = vmatprep.mubr.f32.mxu0 0.0
        %v619 = vand.u32 %v233, 4294901760
        %v620 = vsub.f32 %v233, %v619
        %621 = vmatmul.mubr.f32.gmra.mrb[0].mxu0 %v620
        %v622 = vpop.f32.mrb[0].mxu0
        %v623 = vadd.f32 %v499, %v622
        %v624 = vpop.f32.mrb[0].mxu0
        %625 = vmatprep.mubr.f32.mxu0 0.0
        %v626 = vand.u32 %v236, 4294901760
        %v627 = vsub.f32 %v236, %v626
        %628 = vmatmul.mubr.f32.gmra.mrb[0].mxu0 %v627
        %v629 = vpop.f32.mrb[0].mxu0
        %v630 = vadd.f32 %v505, %v629
        %v631 = vpop.f32.mrb[0].mxu0
        %632 = vdwg.mxu0
        %633 = vmatprep.subr.mxu0 0.0
        %v634 = vand.u32 %v211, 4294901760
        %635 = vmatpush1.msra.mxu0 %v634
        %636 = vmatprep.subr.mxu0 0.0
        %v637 = vand.u32 %v212, 4294901760
        %638 = vmatpush1.msra.mxu0 %v637
        %639 = vmatprep.subr.mxu0 0.0
        %640 = vmatpush1.msra.mxu0 0.0
        %641 = vmatprep.subr.mxu0 0.0
        %642 = vmatpush1.msra.mxu0 0.0
        %643 = vmatprep.subr.mxu0 0.0
        %644 = vmatpush1.msra.mxu0 0.0
        %645 = vmatprep.subr.mxu0 0.0
        %646 = vmatpush1.msra.mxu0 0.0
        %647 = vmatprep.subr.mxu0 0.0
        %648 = vmatpush1.msra.mxu0 0.0
        %649 = vmatprep.subr.mxu0 0.0
        %650 = vmatpush1.msra.mxu0 0.0
        %651 = vmatprep.subr.mxu0 0.0
        %652 = vmatpush1.msra.mxu0 0.0
        %653 = vmatprep.subr.mxu0 0.0
        %654 = vmatpush1.msra.mxu0 0.0
        %655 = vmatprep.subr.mxu0 0.0
        %656 = vmatpush1.msra.mxu0 0.0
        %657 = vmatprep.subr.mxu0 0.0
        %658 = vmatpush1.msra.mxu0 0.0
        %659 = vmatprep.subr.mxu0 0.0
        %660 = vmatpush1.msra.mxu0 0.0
        %661 = vmatprep.subr.mxu0 0.0
        %662 = vmatpush1.msra.mxu0 0.0
        %663 = vmatprep.subr.mxu0 0.0
        %664 = vmatpush1.msra.mxu0 0.0
        %665 = vmatprep.subr.mxu0 0.0
        %666 = vmatpush1.msra.mxu0 0.0
        %667 = vmatprep.subr.mxu0 0.0
        %668 = vmatpush1.msra.mxu0 0.0
        %669 = vmatprep.subr.mxu0 0.0
        %670 = vmatpush1.msra.mxu0 0.0
        %671 = vmatprep.subr.mxu0 0.0
        %672 = vmatpush1.msra.mxu0 0.0
        %673 = vmatprep.subr.mxu0 0.0
        %674 = vmatpush1.msra.mxu0 0.0
        %675 = vmatprep.subr.mxu0 0.0
        %676 = vmatpush1.msra.mxu0 0.0
        %677 = vmatprep.subr.mxu0 0.0
        %678 = vmatpush1.msra.mxu0 0.0
        %679 = vmatprep.subr.mxu0 0.0
        %680 = vmatpush1.msra.mxu0 0.0
        %681 = vmatprep.subr.mxu0 0.0
        %682 = vmatpush1.msra.mxu0 0.0
        %683 = vmatprep.subr.mxu0 0.0
        %684 = vmatpush1.msra.mxu0 0.0
        %685 = vmatprep.subr.mxu0 0.0
        %686 = vmatpush1.msra.mxu0 0.0
        %687 = vmatprep.subr.mxu0 0.0
        %688 = vmatpush1.msra.mxu0 0.0
        %689 = vmatprep.subr.mxu0 0.0
        %690 = vmatpush1.msra.mxu0 0.0
        %691 = vmatprep.subr.mxu0 0.0
        %692 = vmatpush1.msra.mxu0 0.0
        %693 = vmatprep.subr.mxu0 0.0
        %694 = vmatpush1.msra.mxu0 0.0
        %695 = vmatprep.subr.mxu0 0.0
        %696 = vmatpush1.msra.mxu0 0.0
        %697 = vmatprep.subr.mxu0 0.0
        %698 = vmatpush1.msra.mxu0 0.0
        %699 = vmatprep.mubr.f32.mxu0 0.0
        %v700 = vand.u32 %v215, 4294901760
        %v701 = vsub.f32 %v215, %v700
        %v702 = vand.u32 %v701, 4294901760
        %703 = vmatmul.mubr.f32.gmra.mrb[0].mxu0 %v702
        %v704 = vpop.f32.mrb[0].mxu0
        %v705 = vadd.f32 %v581, %v704
        %v706 = vpop.f32.mrb[0].mxu0
        %707 = vmatprep.mubr.f32.mxu0 0.0
        %v708 = vand.u32 %v218, 4294901760
        %v709 = vsub.f32 %v218, %v708
        %v710 = vand.u32 %v709, 4294901760
        %711 = vmatmul.mubr.f32.gmra.mrb[0].mxu0 %v710
        %v712 = vpop.f32.mrb[0].mxu0
        %v713 = vadd.f32 %v588, %v712
        %v714 = vpop.f32.mrb[0].mxu0
        %715 = vmatprep.mubr.f32.mxu0 0.0
        %v716 = vand.u32 %v221, 4294901760
        %v717 = vsub.f32 %v221, %v716
        %v718 = vand.u32 %v717, 4294901760
        %719 = vmatmul.mubr.f32.gmra.mrb[0].mxu0 %v718
        %v720 = vpop.f32.mrb[0].mxu0
        %v721 = vadd.f32 %v595, %v720
        %v722 = vpop.f32.mrb[0].mxu0
        %723 = vmatprep.mubr.f32.mxu0 0.0
        %v724 = vand.u32 %v224, 4294901760
        %v725 = vsub.f32 %v224, %v724
        %v726 = vand.u32 %v725, 4294901760
        %727 = vmatmul.mubr.f32.gmra.mrb[0].mxu0 %v726
        %v728 = vpop.f32.mrb[0].mxu0
        %v729 = vadd.f32 %v602, %v728
        %v730 = vpop.f32.mrb[0].mxu0
        %731 = vmatprep.mubr.f32.mxu0 0.0
        %v732 = vand.u32 %v227, 4294901760
        %v733 = vsub.f32 %v227, %v732
        %v734 = vand.u32 %v733, 4294901760
        %735 = vmatmul.mubr.f32.gmra.mrb[0].mxu0 %v734
        %v736 = vpop.f32.mrb[0].mxu0
        %v737 = vadd.f32 %v609, %v736
        %v738 = vpop.f32.mrb[0].mxu0
        %739 = vmatprep.mubr.f32.mxu0 0.0
        %v740 = vand.u32 %v230, 4294901760
        %v741 = vsub.f32 %v230, %v740
        %v742 = vand.u32 %v741, 4294901760
        %743 = vmatmul.mubr.f32.gmra.mrb[0].mxu0 %v742
        %v744 = vpop.f32.mrb[0].mxu0
        %v745 = vadd.f32 %v616, %v744
        %v746 = vpop.f32.mrb[0].mxu0
        %747 = vmatprep.mubr.f32.mxu0 0.0
        %v748 = vand.u32 %v233, 4294901760
        %v749 = vsub.f32 %v233, %v748
        %v750 = vand.u32 %v749, 4294901760
        %751 = vmatmul.mubr.f32.gmra.mrb[0].mxu0 %v750
        %v752 = vpop.f32.mrb[0].mxu0
        %v753 = vadd.f32 %v623, %v752
        %v754 = vpop.f32.mrb[0].mxu0
        %755 = vmatprep.mubr.f32.mxu0 0.0
        %v756 = vand.u32 %v236, 4294901760
        %v757 = vsub.f32 %v236, %v756
        %v758 = vand.u32 %v757, 4294901760
        %759 = vmatmul.mubr.f32.gmra.mrb[0].mxu0 %v758
        %v760 = vpop.f32.mrb[0].mxu0
        %v761 = vadd.f32 %v630, %v760
        %v762 = vpop.f32.mrb[0].mxu0
        %763 = vdwg.mxu0
        %764 = vmatprep.subr.mxu0 0.0
        %v765 = vand.u32 %v211, 4294901760
        %v766 = vsub.f32 %v211, %v765
        %v767 = vand.u32 %v766, 4294901760
        %768 = vmatpush1.msra.mxu0 %v767
        %769 = vmatprep.subr.mxu0 0.0
        %v770 = vand.u32 %v212, 4294901760
        %v771 = vsub.f32 %v212, %v770
        %v772 = vand.u32 %v771, 4294901760
        %773 = vmatpush1.msra.mxu0 %v772
        %774 = vmatprep.subr.mxu0 0.0
        %775 = vmatpush1.msra.mxu0 0.0
        %776 = vmatprep.subr.mxu0 0.0
        %777 = vmatpush1.msra.mxu0 0.0
        %778 = vmatprep.subr.mxu0 0.0
        %779 = vmatpush1.msra.mxu0 0.0
        %780 = vmatprep.subr.mxu0 0.0
        %781 = vmatpush1.msra.mxu0 0.0
        %782 = vmatprep.subr.mxu0 0.0
        %783 = vmatpush1.msra.mxu0 0.0
        %784 = vmatprep.subr.mxu0 0.0
        %785 = vmatpush1.msra.mxu0 0.0
        %786 = vmatprep.subr.mxu0 0.0
        %787 = vmatpush1.msra.mxu0 0.0
        %788 = vmatprep.subr.mxu0 0.0
        %789 = vmatpush1.msra.mxu0 0.0
        %790 = vmatprep.subr.mxu0 0.0
        %791 = vmatpush1.msra.mxu0 0.0
        %792 = vmatprep.subr.mxu0 0.0
        %793 = vmatpush1.msra.mxu0 0.0
        %794 = vmatprep.subr.mxu0 0.0
        %795 = vmatpush1.msra.mxu0 0.0
        %796 = vmatprep.subr.mxu0 0.0
        %797 = vmatpush1.msra.mxu0 0.0
        %798 = vmatprep.subr.mxu0 0.0
        %799 = vmatpush1.msra.mxu0 0.0
        %800 = vmatprep.subr.mxu0 0.0
        %801 = vmatpush1.msra.mxu0 0.0
        %802 = vmatprep.subr.mxu0 0.0
        %803 = vmatpush1.msra.mxu0 0.0
        %804 = vmatprep.subr.mxu0 0.0
        %805 = vmatpush1.msra.mxu0 0.0
        %806 = vmatprep.subr.mxu0 0.0
        %807 = vmatpush1.msra.mxu0 0.0
        %808 = vmatprep.subr.mxu0 0.0
        %809 = vmatpush1.msra.mxu0 0.0
        %810 = vmatprep.subr.mxu0 0.0
        %811 = vmatpush1.msra.mxu0 0.0
        %812 = vmatprep.subr.mxu0 0.0
        %813 = vmatpush1.msra.mxu0 0.0
        %814 = vmatprep.subr.mxu0 0.0
        %815 = vmatpush1.msra.mxu0 0.0
        %816 = vmatprep.subr.mxu0 0.0
        %817 = vmatpush1.msra.mxu0 0.0
        %818 = vmatprep.subr.mxu0 0.0
        %819 = vmatpush1.msra.mxu0 0.0
        %820 = vmatprep.subr.mxu0 0.0
        %821 = vmatpush1.msra.mxu0 0.0
        %822 = vmatprep.subr.mxu0 0.0
        %823 = vmatpush1.msra.mxu0 0.0
        %824 = vmatprep.subr.mxu0 0.0
        %825 = vmatpush1.msra.mxu0 0.0
        %826 = vmatprep.subr.mxu0 0.0
        %827 = vmatpush1.msra.mxu0 0.0
        %828 = vmatprep.subr.mxu0 0.0
        %829 = vmatpush1.msra.mxu0 0.0
        %830 = vmatprep.subr.mxu0 0.0
        %831 = vmatpush1.msra.mxu0 0.0
        %832 = vmatprep.subr.mxu0 0.0
        %833 = vmatpush1.msra.mxu0 0.0
        %834 = vmatprep.mubr.f32.mxu0 0.0
        %v835 = vand.u32 %v215, 4294901760
        %836 = vmatmul.mubr.f32.gmra.mrb[0].mxu0 %v835
        %v837 = vpop.f32.mrb[0].mxu0
        %v838 = vadd.f32 %v705, %v837
        %v839 = vpop.f32.mrb[0].mxu0
        %840 = vmatprep.mubr.f32.mxu0 0.0
        %v841 = vand.u32 %v218, 4294901760
        %842 = vmatmul.mubr.f32.gmra.mrb[0].mxu0 %v841
        %v843 = vpop.f32.mrb[0].mxu0
        %v844 = vadd.f32 %v713, %v843
        %v845 = vpop.f32.mrb[0].mxu0
        %846 = vmatprep.mubr.f32.mxu0 0.0
        %v847 = vand.u32 %v221, 4294901760
        %848 = vmatmul.mubr.f32.gmra.mrb[0].mxu0 %v847
        %v849 = vpop.f32.mrb[0].mxu0
        %v850 = vadd.f32 %v721, %v849
        %v851 = vpop.f32.mrb[0].mxu0
        %852 = vmatprep.mubr.f32.mxu0 0.0
        %v853 = vand.u32 %v224, 4294901760
        %854 = vmatmul.mubr.f32.gmra.mrb[0].mxu0 %v853
        %v855 = vpop.f32.mrb[0].mxu0
        %v856 = vadd.f32 %v729, %v855
        %v857 = vpop.f32.mrb[0].mxu0
        %858 = vmatprep.mubr.f32.mxu0 0.0
        %v859 = vand.u32 %v227, 4294901760
        %860 = vmatmul.mubr.f32.gmra.mrb[0].mxu0 %v859
        %v861 = vpop.f32.mrb[0].mxu0
        %v862 = vadd.f32 %v737, %v861
        %v863 = vpop.f32.mrb[0].mxu0
        %864 = vmatprep.mubr.f32.mxu0 0.0
        %v865 = vand.u32 %v230, 4294901760
        %866 = vmatmul.mubr.f32.gmra.mrb[0].mxu0 %v865
        %v867 = vpop.f32.mrb[0].mxu0
        %v868 = vadd.f32 %v745, %v867
        %v869 = vpop.f32.mrb[0].mxu0
        %870 = vmatprep.mubr.f32.mxu0 0.0
        %v871 = vand.u32 %v233, 4294901760
        %872 = vmatmul.mubr.f32.gmra.mrb[0].mxu0 %v871
        %v873 = vpop.f32.mrb[0].mxu0
        %v874 = vadd.f32 %v753, %v873
        %v875 = vpop.f32.mrb[0].mxu0
        %876 = vmatprep.mubr.f32.mxu0 0.0
        %v877 = vand.u32 %v236, 4294901760
        %878 = vmatmul.mubr.f32.gmra.mrb[0].mxu0 %v877
        %v879 = vpop.f32.mrb[0].mxu0
        %v880 = vadd.f32 %v761, %v879
        %v881 = vpop.f32.mrb[0].mxu0
        %882 = vdwg.mxu0
        %883 = vmatprep.subr.mxu0 0.0
        %v884 = vand.u32 %v211, 4294901760
        %885 = vmatpush1.msra.mxu0 %v884
        %886 = vmatprep.subr.mxu0 0.0
        %v887 = vand.u32 %v212, 4294901760
        %888 = vmatpush1.msra.mxu0 %v887
        %889 = vmatprep.subr.mxu0 0.0
        %890 = vmatpush1.msra.mxu0 0.0
        %891 = vmatprep.subr.mxu0 0.0
        %892 = vmatpush1.msra.mxu0 0.0
        %893 = vmatprep.subr.mxu0 0.0
        %894 = vmatpush1.msra.mxu0 0.0
        %895 = vmatprep.subr.mxu0 0.0
        %896 = vmatpush1.msra.mxu0 0.0
        %897 = vmatprep.subr.mxu0 0.0
        %898 = vmatpush1.msra.mxu0 0.0
        %899 = vmatprep.subr.mxu0 0.0
        %900 = vmatpush1.msra.mxu0 0.0
        %901 = vmatprep.subr.mxu0 0.0
        %902 = vmatpush1.msra.mxu0 0.0
        %903 = vmatprep.subr.mxu0 0.0
        %904 = vmatpush1.msra.mxu0 0.0
        %905 = vmatprep.subr.mxu0 0.0
        %906 = vmatpush1.msra.mxu0 0.0
        %907 = vmatprep.subr.mxu0 0.0
        %908 = vmatpush1.msra.mxu0 0.0
        %909 = vmatprep.subr.mxu0 0.0
        %910 = vmatpush1.msra.mxu0 0.0
        %911 = vmatprep.subr.mxu0 0.0
        %912 = vmatpush1.msra.mxu0 0.0
        %913 = vmatprep.subr.mxu0 0.0
        %914 = vmatpush1.msra.mxu0 0.0
        %915 = vmatprep.subr.mxu0 0.0
        %916 = vmatpush1.msra.mxu0 0.0
        %917 = vmatprep.subr.mxu0 0.0
        %918 = vmatpush1.msra.mxu0 0.0
        %919 = vmatprep.subr.mxu0 0.0
        %920 = vmatpush1.msra.mxu0 0.0
        %921 = vmatprep.subr.mxu0 0.0
        %922 = vmatpush1.msra.mxu0 0.0
        %923 = vmatprep.subr.mxu0 0.0
        %924 = vmatpush1.msra.mxu0 0.0
        %925 = vmatprep.subr.mxu0 0.0
        %926 = vmatpush1.msra.mxu0 0.0
        %927 = vmatprep.subr.mxu0 0.0
        %928 = vmatpush1.msra.mxu0 0.0
        %929 = vmatprep.subr.mxu0 0.0
        %930 = vmatpush1.msra.mxu0 0.0
        %931 = vmatprep.subr.mxu0 0.0
        %932 = vmatpush1.msra.mxu0 0.0
        %933 = vmatprep.subr.mxu0 0.0
        %934 = vmatpush1.msra.mxu0 0.0
        %935 = vmatprep.subr.mxu0 0.0
        %936 = vmatpush1.msra.mxu0 0.0
        %937 = vmatprep.subr.mxu0 0.0
        %938 = vmatpush1.msra.mxu0 0.0
        %939 = vmatprep.subr.mxu0 0.0
        %940 = vmatpush1.msra.mxu0 0.0
        %941 = vmatprep.subr.mxu0 0.0
        %942 = vmatpush1.msra.mxu0 0.0
        %943 = vmatprep.subr.mxu0 0.0
        %944 = vmatpush1.msra.mxu0 0.0
        %945 = vmatprep.subr.mxu0 0.0
        %946 = vmatpush1.msra.mxu0 0.0
        %947 = vmatprep.subr.mxu0 0.0
        %948 = vmatpush1.msra.mxu0 0.0
        %949 = vmatprep.mubr.f32.mxu0 0.0
        %v950 = vand.u32 %v215, 4294901760
        %951 = vmatmul.mubr.f32.gmra.mrb[0].mxu0 %v950
        %v952 = vpop.f32.mrb[0].mxu0
        %v953 = vadd.f32 %v838, %v952
        %v954 = vpop.f32.mrb[0].mxu0
        %955 = vmatprep.mubr.f32.mxu0 0.0
        %v956 = vand.u32 %v218, 4294901760
        %957 = vmatmul.mubr.f32.gmra.mrb[0].mxu0 %v956
        %v958 = vpop.f32.mrb[0].mxu0
        %v959 = vadd.f32 %v844, %v958
        %v960 = vpop.f32.mrb[0].mxu0
        %961 = vmatprep.mubr.f32.mxu0 0.0
        %v962 = vand.u32 %v221, 4294901760
        %963 = vmatmul.mubr.f32.gmra.mrb[0].mxu0 %v962
        %v964 = vpop.f32.mrb[0].mxu0
        %v965 = vadd.f32 %v850, %v964
        %v966 = vpop.f32.mrb[0].mxu0
        %967 = vmatprep.mubr.f32.mxu0 0.0
        %v968 = vand.u32 %v224, 4294901760
        %969 = vmatmul.mubr.f32.gmra.mrb[0].mxu0 %v968
        %v970 = vpop.f32.mrb[0].mxu0
        %v971 = vadd.f32 %v856, %v970
        %v972 = vpop.f32.mrb[0].mxu0
        %973 = vmatprep.mubr.f32.mxu0 0.0
        %v974 = vand.u32 %v227, 4294901760
        %975 = vmatmul.mubr.f32.gmra.mrb[0].mxu0 %v974
        %v976 = vpop.f32.mrb[0].mxu0
        %v977 = vadd.f32 %v862, %v976
        %v978 = vpop.f32.mrb[0].mxu0
        %979 = vmatprep.mubr.f32.mxu0 0.0
        %v980 = vand.u32 %v230, 4294901760
        %981 = vmatmul.mubr.f32.gmra.mrb[0].mxu0 %v980
        %v982 = vpop.f32.mrb[0].mxu0
        %v983 = vadd.f32 %v868, %v982
        %v984 = vpop.f32.mrb[0].mxu0
        %985 = vmatprep.mubr.f32.mxu0 0.0
        %v986 = vand.u32 %v233, 4294901760
        %987 = vmatmul.mubr.f32.gmra.mrb[0].mxu0 %v986
        %v988 = vpop.f32.mrb[0].mxu0
        %v989 = vadd.f32 %v874, %v988
        %v990 = vpop.f32.mrb[0].mxu0
        %991 = vmatprep.mubr.f32.mxu0 0.0
        %v992 = vand.u32 %v236, 4294901760
        %993 = vmatmul.mubr.f32.gmra.mrb[0].mxu0 %v992
        %v994 = vpop.f32.mrb[0].mxu0
        %v995 = vadd.f32 %v880, %v994
        %v996 = vpop.f32.mrb[0].mxu0
        %997 = vdwg.mxu0
        %vm998 = vcmask 523264
        %999 = vst.msk [vmem:[%s187] sm:$0xff] %vm998, %v953
        %1000 = vst.msk [vmem:[%s187 + $0x8] sm:$0xff] %vm998, %v959
        %1001 = vst.msk [vmem:[%s187 + $0x10] sm:$0xff] %vm998, %v965
        %1002 = vst.msk [vmem:[%s187 + $0x18] sm:$0xff] %vm998, %v971
        %1003 = vst.msk [vmem:[%s187 + $0x20] sm:$0xff] %vm998, %v977
        %1004 = vst.msk [vmem:[%s187 + $0x28] sm:$0xff] %vm998, %v983
        %1005 = vst.msk [vmem:[%s187 + $0x30] sm:$0xff] %vm998, %v989
        %1006 = vst.msk [vmem:[%s187 + $0x38] sm:$0xff] %vm998, %v995
        %s1007 = sand.u32 %s107, 1
        %s1008 = scalar_lea.sflag [#allocation3], %s1007
        %s1009 = sand.u32 %s107, 1
        %s1010 = smul.addr %s1009, 64
        %s1011 = scalar_lea.vmem [#allocation2], %s1010
        // Predicated region
        $region29: #{tpu_custom_call.1} parent=27 // pred_check
          %p1012 = pneg %p117
        $region30: #{tpu_custom_call.1} parent=27 // pred_check_branch
          %1014 = sbr.rel (%p1012) target = $region32
        $region31: #{tpu_custom_call.1} parent=27 // pred_region
          %s1015 = sadd.s32 %s25, %s24
          %s1016 = smul.u32 8, %s23
          %s1018 = ssub.s32 1024, 1024
          %1019 = vsyncadd %s1008, %s1018
          %s1020 = sadd.s32 %s1015, %s1016
          %s1021 = smul.addr %s22, 8
          %s1022 = sadd.s32 %s1020, %s1021
          %s1023 = smul.addr %s1022, 128
          %s1024 = scalar_lea.hbm %s2, %s1023
          %s1025 = sshll.u32 %s1011, 4
          %s1026 = int_to_ptr.vmem [resolvable:$true] %s1025
          %1031 = dma.vmem_to_hbm [thread:$0]  %s1026, 1024, %s1024, %s1008, 128, 128, 8
        $region32: #{tpu_custom_call.1} parent=27 // pred_fallthru
          _
      $region28: #{tpu_custom_call.1} parent=5 // pred_fallthru
        _
      %p1032 = scmp.le.s32.totalorder 2, %s11
      // Predicated region
      $region33: #{tpu_custom_call.1} parent=5 // pred_check
        %p1033 = pneg %p1032
      $region34: #{tpu_custom_call.1} parent=5 // pred_check_branch
        %1035 = sbr.rel (%p1033) target = $region36
      $region35: #{tpu_custom_call.1} parent=5 // pred_region
        %s1036 = ssub.s32 %s11, 2
        // Predicated region
        $region37: #{tpu_custom_call.1} parent=35 // pred_check
          %p1037 = pneg %p123
        $region38: #{tpu_custom_call.1} parent=35 // pred_check_branch
          %1039 = sbr.rel (%p1037) target = $region40
        $region39: #{tpu_custom_call.1} parent=35 // pred_region
          %s1040 = sand.u32 %s108, 1
          %s1041 = scalar_lea.sflag [#allocation3], %s1040
          %s1042 = sand.u32 %s108, 1
          %s1043 = smul.addr %s1042, 64
          %s1044 = scalar_lea.vmem [#allocation2], %s1043
          %1045 = dma.done %s1041, 1024
        $region40: #{tpu_custom_call.1} parent=35 // pred_fallthru
          _
      $region36: #{tpu_custom_call.1} parent=5 // pred_fallthru
        _
    $region6: #{tpu_custom_call.1} parent=1 // loop_footer
      %s15 = sadd.s32 1, %s11
    $region7: #{tpu_custom_call.1} parent=1 // loop_footer_branch
      %10 = sbr.rel target = $region3
    $region8: #{tpu_custom_call.1} parent=1 // loop_exit
      _
    %1046 = vsyncpa [#allocation3], 1
    %s1047 = scalar_lea.sflag [#allocation3], 1
    %1048 = vsyncpa %s1047, 1

</llo_original>
